<compile_context>
chip_gen: v6e
topology: v6e:2x2x1
jax: 0.10.0
libtpu: 0.0.40
codegen_flags: <defaults>
</compile_context>

<pallas_src>
import functools

import jax
import jax.numpy as jnp
from jax.experimental import pallas as pl
from jax.experimental.pallas import tpu as pltpu


# ----------------------------------------------------------------------------
# Pallas kernel
# ----------------------------------------------------------------------------

def _add_pos_kernel(x_ref, pe_ref, o_ref, *, out_dtype):
    # x block : (b_blk, tile_t, F)
    # pe block: (tile_t, F)   -- same block across the batch axis (broadcast)
    x = x_ref[...]
    pe = pe_ref[...]
    o_ref[...] = x.astype(out_dtype) + pe.astype(out_dtype)


# ----------------------------------------------------------------------------
# Wrapper
# ----------------------------------------------------------------------------

def positional_embedding(x, pe_table):
    """x: (B, T, F); pe_table: (max_seq_len, F) -> x + pe_table[:T][None]."""
    B, T, F = x.shape
    max_seq_len, Fp = pe_table.shape
    assert Fp == F and max_seq_len >= T

    # PyTorch promotes x + pe to the wider dtype; mirror that.
    out_dtype = jnp.result_type(x.dtype, pe_table.dtype)
    out_itemsize = jnp.dtype(out_dtype).itemsize

    TARGET_BYTES = 2 * 1024 * 1024  # aim for ~2 MiB x-blocks per pipeline step

    # Row tile: multiple of 8 sublanes (or full T when T % 8 != 0), sized so a
    # (1, tile_t, F) block approaches the target bytes.
    if T % 8 != 0:
        tile_t = T
    else:
        rows = max(8, (TARGET_BYTES // max(F * out_itemsize, 1) // 8) * 8)
        tile_t = int(min(T, rows))
    num_t = pl.cdiv(T, tile_t)

    # (8,128) rule for the pe BlockSpec: a non-multiple-of-8 row tile must equal
    # the table's full first dim -> slice the table once (rare fallback path).
    if tile_t % 8 != 0 and tile_t != max_seq_len:
        pe_in = jax.lax.slice(pe_table, (0, 0), (T, F))
    else:
        pe_in = pe_table

    # Fold batch into the block only when one row tile already covers T and the
    # block is still small; never collapse below 2 batch blocks (v7x megacore).
    b_blk = 1
    if num_t == 1 and B > 1:
        blk_bytes = tile_t * F * out_itemsize
        max_fold = max(1, TARGET_BYTES // max(blk_bytes, 1))
        b_blk = int(max(1, min(B // 2, max_fold)))
    num_b = pl.cdiv(B, b_blk)

    # Batch innermost: pe block index is constant across consecutive steps, so
    # its DMA is skipped (fetched once per row tile, not once per batch).
    grid = (num_t, num_b)

    # VMEM budget: double-buffered x/out/pe blocks + headroom, capped for v7x.
    x_blk = b_blk * tile_t * F * jnp.dtype(x.dtype).itemsize
    o_blk = b_blk * tile_t * F * out_itemsize
    pe_blk = tile_t * F * jnp.dtype(pe_in.dtype).itemsize
    vmem_bytes = int(min(max(4 * (x_blk + o_blk + pe_blk) + (2 << 20), 32 << 20),
                         64 << 20))

    kernel = functools.partial(_add_pos_kernel, out_dtype=out_dtype)

    return pl.pallas_call(
        kernel,
        grid=grid,
        in_specs=[
            pl.BlockSpec((b_blk, tile_t, F), lambda t, b: (b, t, 0)),
            pl.BlockSpec((tile_t, F), lambda t, b: (t, 0)),   # broadcast over batch
        ],
        out_specs=pl.BlockSpec((b_blk, tile_t, F), lambda t, b: (b, t, 0)),
        out_shape=jax.ShapeDtypeStruct((B, T, F), out_dtype),
        compiler_params=pltpu.CompilerParams(
            dimension_semantics=("parallel", "parallel"),   # megacore-shardable
            vmem_limit_bytes=vmem_bytes,
        ),
    )(x, pe_in)


# ----------------------------------------------------------------------------
# Main
# ----------------------------------------------------------------------------

if __name__ == "__main__":
    # Small shapes consistent with the module; F=128 keeps the lane dim dense.
    B = 2
    max_seq_len = 16
    T = 8
    F = 128

    root = jax.random.PRNGKey(0)
    k_x, k_pe = jax.random.split(root, 2)

    x = jax.random.normal(k_x, (B, T, F), jnp.float32)
    pe_table = jax.random.normal(k_pe, (max_seq_len, F), jnp.float32)  # nn.Embedding weight

    fwd = jax.jit(positional_embedding)
    out = fwd(x, pe_table)
    jax.block_until_ready(out)

    # Reference: x + self.pe(self.positions)[None, 0:T]
    ref = x + pe_table[:T][None, :, :]
    assert out.shape == (B, T, F)
    assert bool(jnp.all(jnp.isfinite(out)))
    assert bool(jnp.allclose(out, ref, atol=1e-6, rtol=1e-6))

    print("KERNEL_OK")
</pallas_src>

<mosaic_0001>
module attributes {stable_mosaic.version = 11 : i64} {
  func.func @_add_pos_kernel(%arg0: i32, %arg1: i32, %arg2: memref<1x8x128xf32, #tpu.memory_space<vmem>>, %arg3: memref<8x128xf32, #tpu.memory_space<vmem>>, %arg4: memref<1x8x128xf32, #tpu.memory_space<vmem>>) attributes {dimension_semantics = [#tpu.dimension_semantics<parallel>, #tpu.dimension_semantics<parallel>], iteration_bounds = array<i64: 1, 2>, scalar_prefetch = 0 : i64, scratch_operands = 0 : i64, tpu.core_type = #tpu.core_type<tc>, window_params = [{transform_indices = @transform_0, window_bounds = array<i64: 1, 8, 128>}, {transform_indices = @transform_1, window_bounds = array<i64: 8, 128>}, {transform_indices = @transform_2, window_bounds = array<i64: 1, 8, 128>}]} {
    %c0 = arith.constant 0 : index
    %c0_0 = arith.constant 0 : index
    %c0_1 = arith.constant 0 : index
    %0 = vector.load %arg2[%c0, %c0_0, %c0_1] : memref<1x8x128xf32, #tpu.memory_space<vmem>>, vector<1x8x128xf32>
    %c0_2 = arith.constant 0 : index
    %c0_3 = arith.constant 0 : index
    %1 = vector.load %arg3[%c0_2, %c0_3] : memref<8x128xf32, #tpu.memory_space<vmem>>, vector<8x128xf32>
    %2 = vector.shape_cast %1 : vector<8x128xf32> to vector<1x8x128xf32>
    %3 = arith.addf %0, %2 : vector<1x8x128xf32>
    %c0_4 = arith.constant 0 : index
    %c0_5 = arith.constant 0 : index
    %c0_6 = arith.constant 0 : index
    %4 = vector.load %arg4[%c0_4, %c0_5, %c0_6] : memref<1x8x128xf32, #tpu.memory_space<vmem>>, vector<1x8x128xf32>
    tpu.vector_store %arg4[%c0_4, %c0_5, %c0_6], %3 {strides = array<i32>} : memref<1x8x128xf32, #tpu.memory_space<vmem>>, vector<1x8x128xf32>,
    return
  }
  func.func @transform_0(%arg0: i32, %arg1: i32) -> (i32, i32, i32) {
    %c0_i32 = arith.constant 0 : i32
    %c0_i32_0 = arith.constant 0 : i32
    return %arg1, %arg0, %c0_i32 : i32, i32, i32
  }
  func.func @transform_1(%arg0: i32, %arg1: i32) -> (i32, i32) {
    %c0_i32 = arith.constant 0 : i32
    %c0_i32_0 = arith.constant 0 : i32
    return %arg0, %c0_i32 : i32, i32
  }
  func.func @transform_2(%arg0: i32, %arg1: i32) -> (i32, i32, i32) {
    %c0_i32 = arith.constant 0 : i32
    %c0_i32_0 = arith.constant 0 : i32
    return %arg1, %arg0, %c0_i32 : i32, i32, i32
  }
}

</mosaic_0001>

<llo_original>
// kernel: positional_embedding.1
$region0: #{positional_embedding.1}
  #allocation0 [shape = 'u32[]', space=smem, size = 0x4, offset = 0x4, fixed_abs, tag = 'smem constant byte address 0x4 - core index']
  #allocation1 [shape = 'u32[144,128]{1,0:T(1,128)}', space=vmem, size = 0x12000, scoped, tag = 'internal scratch']
  %s0 = inlined_call_operand.hbm [shape: f32[2,8,128], index: 0, kind: input, shape index: {}]
  %s1 = inlined_call_operand.hbm [shape: f32[16,128], index: 1, kind: input, shape index: {}]
  %s2 = inlined_call_operand.hbm [shape: f32[2,8,128], index: 2, kind: output, shape index: {}]
  %s3 = sld [smem:[#allocation0]]
  $region49: #{positional_embedding.1} parent=0
    _
  %s5 = ssub.s32 1, %s3
  %s6 = scalar_select 0, %s5, %s3
  $region1: #{positional_embedding.1} parent=0
    #allocation2 [shape = 'u8[8192]{0}', space=vmem, size = 0x2000, scoped, tag = 'input window, operand 0']
    #allocation3 [shape = 's32[2]{0}', space=sflag, size = 0x8, scoped, tag = 'scoped memory for positional_embedding.1']
    #allocation4 [shape = 's32[2]{0}', space=sflag, size = 0x8, scoped, tag = 'scoped memory for positional_embedding.1']
    #allocation5 [shape = 'u8[4096]{0}', space=vmem, size = 0x1000, scoped, tag = 'input window, operand 1, single buffered']
    #allocation6 [shape = 's32[1]{0}', space=sflag, size = 0x4, scoped, tag = 'scoped memory for positional_embedding.1']
    #allocation7 [shape = 'u8[8192]{0}', space=vmem, size = 0x2000, scoped, tag = 'output window, operand 0']
    %7 = vsyncpa [#allocation3], 0
    %s8 = scalar_lea.sflag [#allocation3], 1
    %9 = vsyncpa %s8, 0
    %10 = vsyncpa [#allocation6], 0
    %11 = vsyncpa [#allocation4], 0
    %s12 = scalar_lea.sflag [#allocation4], 1
    %13 = vsyncpa %s12, 0
    loop: start=0, step=1, limit=4
    $region2: #{positional_embedding.1} parent=1 // loop_pre_header
      _
    $region3: #{positional_embedding.1} parent=1 // loop_header
      %s15 = sphi 0, %s19
      %p16 = scmp.ge.s32.totalorder %s15, 4
      %s22 = sphi 0, %s34
      %s23 = sphi 0, %s30
      %s24 = sphi 0, %s22
      %s25 = sphi 0, %s23
      %s26 = sphi 0, %s24
      %s27 = sphi 0, %s25
      %s39 = sphi 0, %s41
      %s42 = sphi 0, %s39
      %s43 = sphi 0, %s42
      %s59 = sphi 0, %s43
      %s65 = sphi 0, %s67
      %s68 = sphi 0, %s65
      %s69 = sphi 0, %s68
      %s85 = sphi 0, %s69
      %s93 = sphi 0, %s95
      %s96 = sphi 0, %s93
      %s97 = sphi 0, %s96
      %s113 = sphi 0, %s97
    $region4: #{positional_embedding.1} parent=1 // loop_header_branch
      %18 = sbr.rel (%p16) target = $region8
    $region5: #{positional_embedding.1} parent=1 // loop_body
      %s20 = ssub.s32 %s15, 1
      %s21 = ssub.s32 %s15, 2
      %s28 = sadd.s32 1, %s23
      %p29 = scmp.ge.s32.totalorder %s28, 2
      %s30 = scalar_select %p29, 0, %s28
      %s31 = sadd.s32 1, %s22
      %s32 = scalar_select %p29, %s31, %s22
      %p33 = scmp.ge.s32.totalorder %s32, 1
      %s34 = scalar_select %p33, 0, %s32
      %s35 = ssub.s32 %s23, %s30
      %s36 = ssub.s32 %s22, %s34
      %s37 = sor.u32 %s35, %s36
      %p38 = scmp.eq.s32.totalorder %s37, 0
      %s40 = sadd.s32 %s39, 1
      %s41 = scalar_select %p38, %s39, %s40
      %p44 = pneg %p38
      %p45 = scmp.eq.s32.totalorder %s15, 1
      %p46 = por %p44, %p45
      %p47 = scmp.ne.s32.totalorder %s39, %s42
      %p48 = scmp.eq.s32.totalorder %s15, 0
      %p49 = por %p47, %p48
      %p50 = scmp.ne.s32.totalorder %s39, %s42
      %p51 = scmp.eq.s32.totalorder %s20, 1
      %p52 = por %p50, %p51
      %p53 = scmp.ne.s32.totalorder %s42, %s43
      %p54 = scmp.eq.s32.totalorder %s20, 0
      %p55 = por %p53, %p54
      %p56 = scmp.ne.s32.totalorder %s42, %s43
      %p57 = scmp.eq.s32.totalorder %s21, 1
      %p58 = por %p56, %p57
      %p60 = scmp.ne.s32.totalorder %s43, %s59
      %p61 = scmp.eq.s32.totalorder %s21, 0
      %p62 = por %p60, %p61
      %s63 = ssub.s32 %s22, %s34
      %p64 = scmp.eq.s32.totalorder %s63, 0
      %s66 = sadd.s32 %s65, 1
      %s67 = scalar_select %p64, %s65, %s66
      %p70 = pneg %p64
      %p71 = scmp.eq.s32.totalorder %s15, 1
      %p72 = por %p70, %p71
      %p73 = scmp.ne.s32.totalorder %s65, %s68
      %p74 = scmp.eq.s32.totalorder %s15, 0
      %p75 = por %p73, %p74
      %p76 = scmp.ne.s32.totalorder %s65, %s68
      %p77 = scmp.eq.s32.totalorder %s20, 1
      %p78 = por %p76, %p77
      %p79 = scmp.ne.s32.totalorder %s68, %s69
      %p80 = scmp.eq.s32.totalorder %s20, 0
      %p81 = por %p79, %p80
      %p82 = scmp.ne.s32.totalorder %s68, %s69
      %p83 = scmp.eq.s32.totalorder %s21, 1
      %p84 = por %p82, %p83
      %p86 = scmp.ne.s32.totalorder %s69, %s85
      %p87 = scmp.eq.s32.totalorder %s21, 0
      %p88 = por %p86, %p87
      %s89 = ssub.s32 %s23, %s30
      %s90 = ssub.s32 %s22, %s34
      %s91 = sor.u32 %s89, %s90
      %p92 = scmp.eq.s32.totalorder %s91, 0
      %s94 = sadd.s32 %s93, 1
      %s95 = scalar_select %p92, %s93, %s94
      %p98 = pneg %p92
      %p99 = scmp.eq.s32.totalorder %s15, 1
      %p100 = por %p98, %p99
      %p101 = scmp.ne.s32.totalorder %s93, %s96
      %p102 = scmp.eq.s32.totalorder %s15, 0
      %p103 = por %p101, %p102
      %p104 = scmp.ne.s32.totalorder %s93, %s96
      %p105 = scmp.eq.s32.totalorder %s20, 1
      %p106 = por %p104, %p105
      %p107 = scmp.ne.s32.totalorder %s96, %s97
      %p108 = scmp.eq.s32.totalorder %s20, 0
      %p109 = por %p107, %p108
      %p110 = scmp.ne.s32.totalorder %s96, %s97
      %p111 = scmp.eq.s32.totalorder %s21, 1
      %p112 = por %p110, %p111
      %p114 = scmp.ne.s32.totalorder %s97, %s113
      %p115 = scmp.eq.s32.totalorder %s21, 0
      %p116 = por %p114, %p115
      %p117 = scmp.le.s32.totalorder 1, %s15
      %p118 = scmp.lt.s32.totalorder %s15, 3
      %p119 = pnand %p117, %p118
      %p120 = pneg %p119
      // Predicated region
      $region9: #{positional_embedding.1} parent=5 // pred_check
        _
      $region10: #{positional_embedding.1} parent=5 // pred_check_branch
        %122 = sbr.rel (%p119) target = $region12
      $region11: #{positional_embedding.1} parent=5 // pred_region
        %s123 = ssub.s32 %s15, 1
        // Predicated region
        $region13: #{positional_embedding.1} parent=11 // pred_check
          %p124 = pneg %p81
        $region14: #{positional_embedding.1} parent=11 // pred_check_branch
          %126 = sbr.rel (%p124) target = $region16
        $region15: #{positional_embedding.1} parent=11 // pred_region
          %s128 = ssub.s32 128, 128
          %129 = vsyncadd [#allocation6], %s128
          %s130 = smul.addr %s24, 128
          %s131 = scalar_lea.hbm %s1, %s130
          %s133 = sshll.u32 [#allocation5], 4
          %s134 = int_to_ptr.vmem [resolvable:$true] %s133
          %136 = dma.hbm_to_vmem [thread:$0]  %s131, 128, %s134, [#allocation6]
        $region16: #{positional_embedding.1} parent=11 // pred_fallthru
          _
      $region12: #{positional_embedding.1} parent=5 // pred_fallthru
        _
      %p137 = scmp.lt.s32.totalorder %s15, 2
      // Predicated region
      $region17: #{positional_embedding.1} parent=5 // pred_check
        %p138 = pneg %p137
      $region18: #{positional_embedding.1} parent=5 // pred_check_branch
        %140 = sbr.rel (%p138) target = $region20
      $region19: #{positional_embedding.1} parent=5 // pred_region
        // Predicated region
        $region21: #{positional_embedding.1} parent=19 // pred_check
          %p141 = pneg %p49
        $region22: #{positional_embedding.1} parent=19 // pred_check_branch
          %143 = sbr.rel (%p141) target = $region24
        $region23: #{positional_embedding.1} parent=19 // pred_region
          %s144 = sand.u32 %s39, 1
          %s145 = scalar_lea.sflag [#allocation3], %s144
          %s146 = sand.u32 %s39, 1
          %s147 = smul.addr %s146, 8
          %s148 = scalar_lea.vmem [#allocation2], %s147
          %s150 = ssub.s32 128, 128
          %151 = vsyncadd %s145, %s150
          %s152 = sadd.s32 %s22, %s23
          %s153 = smul.addr %s152, 128
          %s154 = scalar_lea.hbm %s0, %s153
          %s156 = sshll.u32 %s148, 4
          %s157 = int_to_ptr.vmem [resolvable:$true] %s156
          %159 = dma.hbm_to_vmem [thread:$0]  %s154, 128, %s157, %s145
        $region24: #{positional_embedding.1} parent=19 // pred_fallthru
          _
      $region20: #{positional_embedding.1} parent=5 // pred_fallthru
        _
      %p160 = scmp.le.s32.totalorder 1, %s15
      %p161 = scmp.lt.s32.totalorder %s15, 3
      %p162 = pnand %p160, %p161
      %p163 = pneg %p162
      // Predicated region
      $region25: #{positional_embedding.1} parent=5 // pred_check
        _
      $region26: #{positional_embedding.1} parent=5 // pred_check_branch
        %165 = sbr.rel (%p162) target = $region28
      $region27: #{positional_embedding.1} parent=5 // pred_region
        %s166 = ssub.s32 %s15, 1
        %s167 = sand.u32 %s42, 1
        %s168 = scalar_lea.sflag [#allocation3], %s167
        %s169 = sand.u32 %s42, 1
        %s170 = smul.addr %s169, 8
        %s171 = scalar_lea.vmem [#allocation2], %s170
        // Predicated region
        $region29: #{positional_embedding.1} parent=27 // pred_check
          %p172 = pneg %p55
        $region30: #{positional_embedding.1} parent=27 // pred_check_branch
          %174 = sbr.rel (%p172) target = $region32
        $region31: #{positional_embedding.1} parent=27 // pred_region
          %175 = dma.done %s168, 128
        $region32: #{positional_embedding.1} parent=27 // pred_fallthru
          _
        // Predicated region
        $region33: #{positional_embedding.1} parent=27 // pred_check
          %p176 = pneg %p81
        $region34: #{positional_embedding.1} parent=27 // pred_check_branch
          %178 = sbr.rel (%p176) target = $region36
        $region35: #{positional_embedding.1} parent=27 // pred_region
          %179 = dma.done [#allocation6], 128
        $region36: #{positional_embedding.1} parent=27 // pred_fallthru
          _
        %s180 = sand.u32 %s42, 1
        %s181 = scalar_lea.sflag [#allocation3], %s180
        %s182 = sand.u32 %s42, 1
        %s183 = smul.addr %s182, 8
        %s184 = scalar_lea.vmem [#allocation2], %s183
        %p185 = pneg %p55
        %p186 = pneg %p52
        %p187 = pneg %p81
        %p188 = pneg %p78
        %p189 = pneg %p109
        %p190 = pneg %p106
        %s191 = sand.u32 %s96, 1
        %s192 = scalar_lea.sflag [#allocation4], %s191
        %s193 = sand.u32 %s96, 1
        %s194 = smul.addr %s193, 8
        %s195 = scalar_lea.vmem [#allocation7], %s194
        %v196 = vld [vmem:[%s171] sm:$0xff]
        %v197 = vld [vmem:[#allocation5] sm:$0xff]
        %v198 = vadd.f32 %v196, %v197
        %199 = vst [vmem:[%s195] sm:$0xff] %v198
        %s200 = sand.u32 %s96, 1
        %s201 = scalar_lea.sflag [#allocation4], %s200
        %s202 = sand.u32 %s96, 1
        %s203 = smul.addr %s202, 8
        %s204 = scalar_lea.vmem [#allocation7], %s203
        // Predicated region
        $region37: #{positional_embedding.1} parent=27 // pred_check
          %p205 = pneg %p106
        $region38: #{positional_embedding.1} parent=27 // pred_check_branch
          %207 = sbr.rel (%p205) target = $region40
        $region39: #{positional_embedding.1} parent=27 // pred_region
          %s209 = ssub.s32 128, 128
          %210 = vsyncadd %s201, %s209
          %s211 = sadd.s32 %s24, %s25
          %s212 = smul.addr %s211, 128
          %s213 = scalar_lea.hbm %s2, %s212
          %s215 = sshll.u32 %s204, 4
          %s216 = int_to_ptr.vmem [resolvable:$true] %s215
          %218 = dma.vmem_to_hbm [thread:$0]  %s216, 128, %s213, %s201
        $region40: #{positional_embedding.1} parent=27 // pred_fallthru
          _
      $region28: #{positional_embedding.1} parent=5 // pred_fallthru
        _
      %p219 = scmp.le.s32.totalorder 2, %s15
      // Predicated region
      $region41: #{positional_embedding.1} parent=5 // pred_check
        %p220 = pneg %p219
      $region42: #{positional_embedding.1} parent=5 // pred_check_branch
        %222 = sbr.rel (%p220) target = $region44
      $region43: #{positional_embedding.1} parent=5 // pred_region
        %s223 = ssub.s32 %s15, 2
        // Predicated region
        $region45: #{positional_embedding.1} parent=43 // pred_check
          %p224 = pneg %p112
        $region46: #{positional_embedding.1} parent=43 // pred_check_branch
          %226 = sbr.rel (%p224) target = $region48
        $region47: #{positional_embedding.1} parent=43 // pred_region
          %s227 = sand.u32 %s97, 1
          %s228 = scalar_lea.sflag [#allocation4], %s227
          %s229 = sand.u32 %s97, 1
          %s230 = smul.addr %s229, 8
          %s231 = scalar_lea.vmem [#allocation7], %s230
          %232 = dma.done %s228, 128
        $region48: #{positional_embedding.1} parent=43 // pred_fallthru
          _
      $region44: #{positional_embedding.1} parent=5 // pred_fallthru
        _
    $region6: #{positional_embedding.1} parent=1 // loop_footer
      %s19 = sadd.s32 1, %s15
    $region7: #{positional_embedding.1} parent=1 // loop_footer_branch
      %14 = sbr.rel target = $region3
    $region8: #{positional_embedding.1} parent=1 // loop_exit
      _
    %233 = vsyncpa [#allocation3], 1
    %s234 = scalar_lea.sflag [#allocation3], 1
    %235 = vsyncpa %s234, 1
    %236 = vsyncpa [#allocation6], 1
    %237 = vsyncpa [#allocation4], 1
    %s238 = scalar_lea.sflag [#allocation4], 1
    %239 = vsyncpa %s238, 1

</llo_original>
